<compile_context>
chip_gen: v6e
topology: v6e:2x2x1
jax: 0.10.0
libtpu: 0.0.40
codegen_flags: <defaults>
</compile_context>

<pallas_src>
import functools

import jax
import jax.numpy as jnp
from jax.experimental import pallas as pl
from jax.experimental.pallas import tpu as pltpu


def _dice_partial_kernel(logits_ref, targets_ref, inter_ref, m1_ref, m2_ref,
                         *, total_rows: int, row_tile: int, needs_mask: bool):
    """Reduce one (N, row_tile, 128) block to per-sample lane partials."""
    probs = jax.nn.sigmoid(logits_ref[...].astype(jnp.float32))
    tgt = targets_ref[...].astype(jnp.float32)

    if needs_mask:
        # Only compiled in when the row grid does not divide evenly; NaN-safe
        # select (not multiply) guards against undefined out-of-bounds rows.
        k = pl.program_id(0)
        row = k * row_tile + jax.lax.broadcasted_iota(
            jnp.int32, probs.shape, dimension=1)
        valid = row < total_rows
        probs = jnp.where(valid, probs, 0.0)
        tgt = jnp.where(valid, tgt, 0.0)

    # Reduce over the row (sublane) axis only; keep lanes.  Cross-lane and
    # cross-tile reduction happens once, outside the kernel.
    inter_ref[0] = jnp.sum(probs * tgt, axis=1)   # (N, 128)
    m1_ref[0] = jnp.sum(probs, axis=1)            # (N, 128)
    m2_ref[0] = jnp.sum(tgt, axis=1)              # (N, 128)


def soft_dice_loss(logits, targets, *, target_block_bytes: int = 2 * 1024 * 1024):
    """Pallas implementation of SoftDiceLoss.forward (PyTorch semantics)."""
    smooth = 1.0
    num = logits.shape[0]
    lanes = 128

    logits2d = logits.reshape(num, -1)
    targets2d = targets.reshape(num, -1)          # keep native dtype
    total_f = logits2d.shape[1]

    # Pad the feature tail only if it is not lane-aligned.  Logits pad with a
    # large negative so sigmoid(pad) == 0 exactly; targets pad with 0.  No
    # per-step mask is needed for this padding.
    rem = total_f % lanes
    if rem:
        pad = lanes - rem
        logits2d = jnp.pad(logits2d, ((0, 0), (0, pad)), constant_values=-1e4)
        targets2d = jnp.pad(targets2d, ((0, 0), (0, pad)), constant_values=0)

    rows = logits2d.shape[1] // lanes
    logits3d = logits2d.reshape(num, rows, lanes)
    targets3d = targets2d.reshape(num, rows, lanes)

    # Row tile sized so the f32 logits block is ~target_block_bytes
    # (multiple of 8 sublanes); capped at the full row extent.
    # Note: for very large N the minimum block (N, 8, 128) may itself be big;
    # keep target_block_bytes / VMEM budget in mind per generation.
    row_tile = max(8, target_block_bytes // (num * lanes * 4))
    row_tile = (row_tile // 8) * 8
    if row_tile >= rows:
        row_tile = rows                            # single block covers all rows
    grid_r = pl.cdiv(rows, row_tile)
    needs_mask = (rows % row_tile) != 0

    kernel = functools.partial(
        _dice_partial_kernel,
        total_rows=rows, row_tile=row_tile, needs_mask=needs_mask)

    part_shape = jax.ShapeDtypeStruct((grid_r, num, lanes), jnp.float32)
    part_spec = pl.BlockSpec((1, num, lanes), lambda k: (k, 0, 0))
    in_spec = pl.BlockSpec((num, row_tile, lanes), lambda k: (0, k, 0))

    inter_p, m1_p, m2_p = pl.pallas_call(
        kernel,
        out_shape=(part_shape, part_shape, part_shape),
        grid_spec=pltpu.PrefetchScalarGridSpec(
            num_scalar_prefetch=0,
            grid=(grid_r,),
            in_specs=[in_spec, in_spec],
            out_specs=(part_spec, part_spec, part_spec),
        ),
        compiler_params=pltpu.CompilerParams(
            dimension_semantics=("parallel",),       # distinct output blocks per
            vmem_limit_bytes=48 * 1024 * 1024),      # step -> safe to parallelize
    )(logits3d, targets3d)

    # Tiny combine in plain JAX: sum over tiles + lanes, then score / mean.
    inter = inter_p.sum(axis=(0, 2))                 # (N,)
    m1 = m1_p.sum(axis=(0, 2))
    m2 = m2_p.sum(axis=(0, 2))
    score = 2.0 * (inter + smooth) / (m1 + m2 + smooth)
    return 1.0 - jnp.sum(score) / num


def _reference_soft_dice_loss(logits, targets):
    smooth = 1.0
    num = logits.shape[0]
    probs = jax.nn.sigmoid(logits.astype(jnp.float32)).reshape(num, -1)
    m2 = targets.reshape(num, -1).astype(jnp.float32)
    inter = jnp.sum(probs * m2, axis=1)
    score = 2.0 * (inter + smooth) / (jnp.sum(probs, 1) + jnp.sum(m2, 1) + smooth)
    return 1.0 - jnp.sum(score) / num


if __name__ == "__main__":
    key = jax.random.PRNGKey(0)
    k1, k2 = jax.random.split(key)

    # Small shapes consistent with a segmentation head: N=2, C=4, H=W=16.
    logits = jax.random.normal(k1, (2, 4, 16, 16), dtype=jnp.float32)
    targets = (jax.random.uniform(k2, (2, 4, 16, 16)) > 0.5).astype(jnp.float32)

    loss = jax.jit(soft_dice_loss)(logits, targets)
    loss = jax.block_until_ready(loss)

    ref = _reference_soft_dice_loss(logits, targets)
    assert jnp.allclose(loss, ref, atol=1e-5, rtol=1e-5), (loss, ref)

    print("KERNEL_OK")
</pallas_src>

<mosaic_0001>
module attributes {stable_mosaic.version = 11 : i64} {
  func.func @_dice_partial_kernel(%arg0: i32, %arg1: memref<2x8x128xf32, #tpu.memory_space<vmem>>, %arg2: memref<2x8x128xf32, #tpu.memory_space<vmem>>, %arg3: memref<1x2x128xf32, #tpu.memory_space<vmem>>, %arg4: memref<1x2x128xf32, #tpu.memory_space<vmem>>, %arg5: memref<1x2x128xf32, #tpu.memory_space<vmem>>) attributes {dimension_semantics = [#tpu.dimension_semantics<parallel>], iteration_bounds = array<i64: 1>, scalar_prefetch = 0 : i64, scratch_operands = 0 : i64, tpu.core_type = #tpu.core_type<tc>, window_params = [{transform_indices = @transform_0, window_bounds = array<i64: 2, 8, 128>}, {transform_indices = @transform_1, window_bounds = array<i64: 2, 8, 128>}, {transform_indices = @transform_2, window_bounds = array<i64: 1, 2, 128>}, {transform_indices = @transform_3, window_bounds = array<i64: 1, 2, 128>}, {transform_indices = @transform_4, window_bounds = array<i64: 1, 2, 128>}]} {
    %c0 = arith.constant 0 : index
    %c0_0 = arith.constant 0 : index
    %c0_1 = arith.constant 0 : index
    %0 = vector.load %arg1[%c0, %c0_0, %c0_1] : memref<2x8x128xf32, #tpu.memory_space<vmem>>, vector<2x8x128xf32>
    %1 = arith.negf %0 : vector<2x8x128xf32>
    %2 = math.exp %1 : vector<2x8x128xf32>
    %cst = arith.constant 1.000000e+00 : f32
    %3 = vector.broadcast %cst : f32 to vector<2x8x128xf32>
    %4 = arith.addf %3, %2 : vector<2x8x128xf32>
    %5 = arith.divf %3, %4 : vector<2x8x128xf32>
    %c0_2 = arith.constant 0 : index
    %c0_3 = arith.constant 0 : index
    %c0_4 = arith.constant 0 : index
    %6 = vector.load %arg2[%c0_2, %c0_3, %c0_4] : memref<2x8x128xf32, #tpu.memory_space<vmem>>, vector<2x8x128xf32>
    %7 = arith.mulf %5, %6 : vector<2x8x128xf32>
    %cst_5 = arith.constant dense<0.000000e+00> : vector<2x128xf32>
    %8 = vector.multi_reduction <add>, %7, %cst_5 [1] : vector<2x8x128xf32> to vector<2x128xf32>
    %c0_6 = arith.constant 0 : index
    %c0_7 = arith.constant 0 : index
    %c0_8 = arith.constant 0 : index
    %9 = vector.load %arg3[%c0_6, %c0_7, %c0_8] : memref<1x2x128xf32, #tpu.memory_space<vmem>>, vector<1x2x128xf32>
    %10 = vector.shape_cast %9 : vector<1x2x128xf32> to vector<2x128xf32>
    %11 = vector.shape_cast %8 : vector<2x128xf32> to vector<1x2x128xf32>
    tpu.vector_store %arg3[%c0_6, %c0_7, %c0_8], %11 {strides = array<i32>} : memref<1x2x128xf32, #tpu.memory_space<vmem>>, vector<1x2x128xf32>,
    %cst_9 = arith.constant dense<0.000000e+00> : vector<2x128xf32>
    %12 = vector.multi_reduction <add>, %5, %cst_9 [1] : vector<2x8x128xf32> to vector<2x128xf32>
    %c0_10 = arith.constant 0 : index
    %c0_11 = arith.constant 0 : index
    %c0_12 = arith.constant 0 : index
    %13 = vector.load %arg4[%c0_10, %c0_11, %c0_12] : memref<1x2x128xf32, #tpu.memory_space<vmem>>, vector<1x2x128xf32>
    %14 = vector.shape_cast %13 : vector<1x2x128xf32> to vector<2x128xf32>
    %15 = vector.shape_cast %12 : vector<2x128xf32> to vector<1x2x128xf32>
    tpu.vector_store %arg4[%c0_10, %c0_11, %c0_12], %15 {strides = array<i32>} : memref<1x2x128xf32, #tpu.memory_space<vmem>>, vector<1x2x128xf32>,
    %cst_13 = arith.constant dense<0.000000e+00> : vector<2x128xf32>
    %16 = vector.multi_reduction <add>, %6, %cst_13 [1] : vector<2x8x128xf32> to vector<2x128xf32>
    %c0_14 = arith.constant 0 : index
    %c0_15 = arith.constant 0 : index
    %c0_16 = arith.constant 0 : index
    %17 = vector.load %arg5[%c0_14, %c0_15, %c0_16] : memref<1x2x128xf32, #tpu.memory_space<vmem>>, vector<1x2x128xf32>
    %18 = vector.shape_cast %17 : vector<1x2x128xf32> to vector<2x128xf32>
    %19 = vector.shape_cast %16 : vector<2x128xf32> to vector<1x2x128xf32>
    tpu.vector_store %arg5[%c0_14, %c0_15, %c0_16], %19 {strides = array<i32>} : memref<1x2x128xf32, #tpu.memory_space<vmem>>, vector<1x2x128xf32>,
    return
  }
  func.func @transform_0(%arg0: i32) -> (i32, i32, i32) {
    %c0_i32 = arith.constant 0 : i32
    %c0_i32_0 = arith.constant 0 : i32
    %c0_i32_1 = arith.constant 0 : i32
    return %c0_i32, %arg0, %c0_i32_0 : i32, i32, i32
  }
  func.func @transform_1(%arg0: i32) -> (i32, i32, i32) {
    %c0_i32 = arith.constant 0 : i32
    %c0_i32_0 = arith.constant 0 : i32
    %c0_i32_1 = arith.constant 0 : i32
    return %c0_i32, %arg0, %c0_i32_0 : i32, i32, i32
  }
  func.func @transform_2(%arg0: i32) -> (i32, i32, i32) {
    %c0_i32 = arith.constant 0 : i32
    %c0_i32_0 = arith.constant 0 : i32
    %c0_i32_1 = arith.constant 0 : i32
    return %arg0, %c0_i32, %c0_i32_0 : i32, i32, i32
  }
  func.func @transform_3(%arg0: i32) -> (i32, i32, i32) {
    %c0_i32 = arith.constant 0 : i32
    %c0_i32_0 = arith.constant 0 : i32
    %c0_i32_1 = arith.constant 0 : i32
    return %arg0, %c0_i32, %c0_i32_0 : i32, i32, i32
  }
  func.func @transform_4(%arg0: i32) -> (i32, i32, i32) {
    %c0_i32 = arith.constant 0 : i32
    %c0_i32_0 = arith.constant 0 : i32
    %c0_i32_1 = arith.constant 0 : i32
    return %arg0, %c0_i32, %c0_i32_0 : i32, i32, i32
  }
}

</mosaic_0001>

<llo_original>
// kernel: soft_dice_loss.1
$region0: #{soft_dice_loss.1}
  #allocation0 [shape = 'u32[]', space=smem, size = 0x4, offset = 0x4, fixed_abs, tag = 'smem constant byte address 0x4 - core index']
  #allocation1 [shape = 'u32[144,128]{1,0:T(1,128)}', space=vmem, size = 0x12000, scoped, tag = 'internal scratch']
  %s0 = inlined_call_operand.vmem [shape: f32[2,8,128], index: 0, kind: input, shape index: {}]
  %s1 = inlined_call_operand.vmem [shape: f32[2,8,128], index: 1, kind: input, shape index: {}]
  %s2 = inlined_call_operand.vmem [shape: f32[1,2,128], index: 2, kind: output, shape index: {0}]
  %s3 = inlined_call_operand.vmem [shape: f32[1,2,128], index: 3, kind: output, shape index: {1}]
  %s4 = inlined_call_operand.vmem [shape: f32[1,2,128], index: 4, kind: output, shape index: {2}]
  %5 = xla_tuple %s2, %s3, %s4
  %s6 = sld [smem:[#allocation0]]
  $region34: #{soft_dice_loss.1} parent=0
    _
  %s8 = ssub.s32 1, %s6
  %s9 = scalar_select 0, %s8, %s6
  // Predicated region
  $region2: #{soft_dice_loss.1} parent=0 // pred_check
    _
  $region3: #{soft_dice_loss.1} parent=0 // pred_check_branch
    %11 = sbr.rel (0) target = $region5
  $region4: #{soft_dice_loss.1} parent=0 // pred_region
    _
  $region5: #{soft_dice_loss.1} parent=0 // pred_fallthru
    _
  // Predicated region
  $region6: #{soft_dice_loss.1} parent=0 // pred_check
    _
  $region7: #{soft_dice_loss.1} parent=0 // pred_check_branch
    %13 = sbr.rel (0) target = $region9
  $region8: #{soft_dice_loss.1} parent=0 // pred_region
    _
  $region9: #{soft_dice_loss.1} parent=0 // pred_fallthru
    _
  %v14 = vld [vmem:[%s0] sm:$0xff]
  %v15 = vld [vmem:[%s0 + $0x8] sm:$0xff]
  %v16 = vxor.u32 %v14, 2147483648
  %v17 = vxor.u32 %v15, 2147483648
  %v18 = vmul.f32 %v16, 1.442695
  %v19 = vpow.pop %v18
  %v20 = vmul.f32 %v17, 1.442695
  %v21 = vpow.pop %v20
  %v22 = vadd.f32 %v19, 1.0
  %v23 = vadd.f32 %v21, 1.0
  %v24 = vrcp.pop %v22
  %v25 = vmul.f32 1.0, %v24
  %v26 = vrcp.pop %v23
  %v27 = vmul.f32 1.0, %v26
  %v28 = vld [vmem:[%s1] sm:$0xff]
  %v29 = vld [vmem:[%s1 + $0x8] sm:$0xff]
  %v30 = vmul.f32 %v25, %v28
  %v31 = vmul.f32 %v27, %v29
  %v32 = vrot.slane %v30, 4
  %v33 = vadd.f32 %v30, %v32
  %v34 = vrot.slane %v33, 2
  %v35 = vadd.f32 %v33, %v34
  %v36 = vrot.slane %v35, 1
  %v37 = vadd.f32 %v35, %v36
  %v38 = vrot.slane %v31, 4
  %v39 = vadd.f32 %v31, %v38
  %v40 = vrot.slane %v39, 2
  %v41 = vadd.f32 %v39, %v40
  %v42 = vrot.slane %v41, 1
  %v43 = vadd.f32 %v41, %v42
  %vm46 = vcmask 1041409
  %v47 = vsel %vm46, %v43, %v37
  %49 = vst [vmem:[%s2] sm:$0x3] %v47
  %v50 = vrot.slane %v25, 4
  %v51 = vadd.f32 %v25, %v50
  %v52 = vrot.slane %v51, 2
  %v53 = vadd.f32 %v51, %v52
  %v54 = vrot.slane %v53, 1
  %v55 = vadd.f32 %v53, %v54
  %v56 = vrot.slane %v27, 4
  %v57 = vadd.f32 %v27, %v56
  %v58 = vrot.slane %v57, 2
  %v59 = vadd.f32 %v57, %v58
  %v60 = vrot.slane %v59, 1
  %v61 = vadd.f32 %v59, %v60
  %v64 = vsel %vm46, %v61, %v55
  %66 = vst [vmem:[%s3] sm:$0x3] %v64
  %v67 = vrot.slane %v28, 4
  %v68 = vadd.f32 %v28, %v67
  %v69 = vrot.slane %v68, 2
  %v70 = vadd.f32 %v68, %v69
  %v71 = vrot.slane %v70, 1
  %v72 = vadd.f32 %v70, %v71
  %v73 = vrot.slane %v29, 4
  %v74 = vadd.f32 %v29, %v73
  %v75 = vrot.slane %v74, 2
  %v76 = vadd.f32 %v74, %v75
  %v77 = vrot.slane %v76, 1
  %v78 = vadd.f32 %v76, %v77
  %v81 = vsel %vm46, %v78, %v72
  %83 = vst [vmem:[%s4] sm:$0x3] %v81
  // Predicated region
  $region10: #{soft_dice_loss.1} parent=0 // pred_check
    _
  $region11: #{soft_dice_loss.1} parent=0 // pred_check_branch
    %85 = sbr.rel (0) target = $region13
  $region12: #{soft_dice_loss.1} parent=0 // pred_region
    _
  $region13: #{soft_dice_loss.1} parent=0 // pred_fallthru
    _
  // Predicated region
  $region14: #{soft_dice_loss.1} parent=0 // pred_check
    _
  $region15: #{soft_dice_loss.1} parent=0 // pred_check_branch
    %87 = sbr.rel (0) target = $region17
  $region16: #{soft_dice_loss.1} parent=0 // pred_region
    _
  $region17: #{soft_dice_loss.1} parent=0 // pred_fallthru
    _
  // Predicated region
  $region18: #{soft_dice_loss.1} parent=0 // pred_check
    _
  $region19: #{soft_dice_loss.1} parent=0 // pred_check_branch
    %89 = sbr.rel (0) target = $region21
  $region20: #{soft_dice_loss.1} parent=0 // pred_region
    _
  $region21: #{soft_dice_loss.1} parent=0 // pred_fallthru
    _
  // Predicated region
  $region22: #{soft_dice_loss.1} parent=0 // pred_check
    _
  $region23: #{soft_dice_loss.1} parent=0 // pred_check_branch
    %91 = sbr.rel (0) target = $region25
  $region24: #{soft_dice_loss.1} parent=0 // pred_region
    _
  $region25: #{soft_dice_loss.1} parent=0 // pred_fallthru
    _
  // Predicated region
  $region26: #{soft_dice_loss.1} parent=0 // pred_check
    _
  $region27: #{soft_dice_loss.1} parent=0 // pred_check_branch
    %93 = sbr.rel (0) target = $region29
  $region28: #{soft_dice_loss.1} parent=0 // pred_region
    _
  $region29: #{soft_dice_loss.1} parent=0 // pred_fallthru
    _
  // Predicated region
  $region30: #{soft_dice_loss.1} parent=0 // pred_check
    _
  $region31: #{soft_dice_loss.1} parent=0 // pred_check_branch
    %95 = sbr.rel (0) target = $region33
  $region32: #{soft_dice_loss.1} parent=0 // pred_region
    _
  $region33: #{soft_dice_loss.1} parent=0 // pred_fallthru
    _

</llo_original>
